<compile_context>
chip_gen: v6e
topology: v6e:2x2x1
jax: 0.10.0
libtpu: 0.0.40
codegen_flags: <defaults>
</compile_context>

<pallas_src>
from functools import partial

import numpy as np
import jax
import jax.numpy as jnp
from jax.experimental import pallas as pl
from jax.experimental.pallas import tpu as pltpu


# ----------------------------------------------------------------------------
# Host-side bookkeeping (mirrors offset2bincount / pad_tensors / gen_seq_masks).
# ----------------------------------------------------------------------------
def offset2bincount(offset):
    return np.diff(np.asarray(offset, dtype=np.int64), prepend=0)


def _round_up(x, m):
    return ((int(x) + m - 1) // m) * m


def _bucket(n, tile):
    """Round up to a multiple of `tile`; for larger sizes snap to the next power
    of two so recompiles are bounded to a few shape buckets."""
    n = _round_up(max(int(n), 1), tile)
    if n > 4 * tile:
        n = _round_up(1 << (n - 1).bit_length(), tile)
    return n


def _vmem_limit_bytes():
    """Generation-aware VMEM budget: ~3/4 of physical per-core VMEM
    (v5e/v6e 128 MiB -> 96 MiB, v7x 64 MiB -> 48 MiB); safe fallback 48 MiB."""
    try:
        cap = int(getattr(pltpu.get_tpu_info(), "vmem_capacity_bytes", 0) or 0)
    except Exception:
        cap = 0
    if cap <= 0:
        cap = 64 * 1024 * 1024
    return int(min(cap * 3 // 4, 100 * 1024 * 1024))


def _pad_rows(x, counts, maxlen):
    """Pack variable-length row segments of x:(sum(counts), C) into a
    zero-padded (B, maxlen, C) array (equivalent of pad_tensors_wgrad)."""
    counts = np.asarray(counts, dtype=np.int64)
    B = len(counts)
    starts = np.concatenate([[0], np.cumsum(counts)[:-1]])
    idx = np.zeros((B, maxlen), np.int32)
    mask = np.zeros((B, maxlen), bool)
    for i in range(B):
        c, s = int(counts[i]), int(starts[i])
        idx[i, :c] = np.arange(s, s + c, dtype=np.int32)
        mask[i, :c] = True
    gathered = jnp.take(x, jnp.asarray(idx.reshape(-1)), axis=0)
    gathered = gathered.reshape(B, maxlen, x.shape[1])
    return jnp.where(jnp.asarray(mask)[:, :, None], gathered, 0.0)


def _unpad_indices(counts, maxlen):
    counts = np.asarray(counts, dtype=np.int64)
    return np.concatenate(
        [i * maxlen + np.arange(int(c)) for i, c in enumerate(counts)]
    ).astype(np.int32)


# ----------------------------------------------------------------------------
# Pallas kernels
# ----------------------------------------------------------------------------
def _linear_kernel(x_ref, w_ref, b_ref, o_ref):
    # bf16 operands -> MXU full rate, fp32 accumulation, fp32 bias add.
    x = x_ref[...].astype(jnp.bfloat16)
    w = w_ref[...].astype(jnp.bfloat16)
    acc = jnp.dot(x, w, preferred_element_type=jnp.float32)
    o_ref[...] = (acc + b_ref[...]).astype(o_ref.dtype)


def pallas_linear(x, w, b, *, out_dtype=jnp.bfloat16, tm=512):
    """y = x @ w + b ; x:(N,Cin), w:(Cin,Cout) bf16, b:(Cout,) fp32.
    Row-tiled (grid over row tiles), weights resident, bf16 output by default."""
    n, cin = x.shape
    cout = w.shape[1]
    tm = min(tm, _round_up(n, 8))
    n_pad = _round_up(n, tm)
    if n_pad != n:
        x = jnp.pad(x, ((0, n_pad - n), (0, 0)))
    out = pl.pallas_call(
        _linear_kernel,
        out_shape=jax.ShapeDtypeStruct((n_pad, cout), out_dtype),
        grid=(n_pad // tm,),
        in_specs=[
            pl.BlockSpec((tm, cin), lambda i: (i, 0)),     # pipelined row tile
            pl.BlockSpec((cin, cout), lambda i: (0, 0)),   # resident weight (constant index)
            pl.BlockSpec((1, cout), lambda i: (0, 0)),     # resident bias
        ],
        out_specs=pl.BlockSpec((tm, cout), lambda i: (i, 0)),
        compiler_params=pltpu.CompilerParams(
            dimension_semantics=("parallel",),
            vmem_limit_bytes=_vmem_limit_bytes(),
        ),
    )(x, w, b.reshape(1, cout))
    return out[:n]


def _flash_xattn_kernel(nw_ref, q_ref, k_ref, v_ref, o_ref,
                        m_sc, l_sc, acc_sc, *, num_heads, tkv):
    # nw_ref: SMEM (B,) int32 ; q_ref: (H, TQ, hd) bf16 ; k_ref/v_ref: (H, TKV, hd) bf16
    # o_ref: (TQ, C) bf16 ; scratch m/l: (H, TQ, 1) f32 ; acc: (H, TQ, hd) f32
    b = pl.program_id(0)
    kvi = pl.program_id(2)
    n_valid = nw_ref[b]

    @pl.when(kvi == 0)
    def _init():
        m_sc[...] = jnp.full(m_sc.shape, -jnp.inf, m_sc.dtype)
        l_sc[...] = jnp.zeros(l_sc.shape, l_sc.dtype)
        acc_sc[...] = jnp.zeros(acc_sc.shape, acc_sc.dtype)

    kv_start = kvi * tkv

    # Skip kv tiles that are entirely padding (softmax cost scales with the real
    # context length, not the padded one).
    @pl.when(kv_start < n_valid)
    def _compute():
        # additive key-padding bias, computed once per kv tile (shared across heads)
        key_idx = jax.lax.broadcasted_iota(jnp.int32, (1, tkv), 1) + kv_start
        bias = jnp.where(key_idx < n_valid, 0.0, -1e30).astype(jnp.float32)  # (1, TKV)
        for h in range(num_heads):           # small static head count
            qh = q_ref[h]                    # (TQ, hd) bf16, softmax scale folded into W_q
            kh = k_ref[h]                    # (TKV, hd) bf16
            vh = v_ref[h]                    # (TKV, hd) bf16
            s = jax.lax.dot_general(         # bf16 in / fp32 accumulate
                qh, kh, (((1,), (1,)), ((), ())),
                preferred_element_type=jnp.float32) + bias        # (TQ, TKV)
            m_prev = m_sc[h]
            m_new = jnp.maximum(m_prev, jnp.max(s, axis=-1, keepdims=True))
            alpha = jnp.exp(m_prev - m_new)
            p = jnp.exp(s - m_new)
            l_sc[h] = alpha * l_sc[h] + jnp.sum(p, axis=-1, keepdims=True)
            acc_sc[h] = alpha * acc_sc[h] + jnp.dot(
                p.astype(jnp.bfloat16), vh, preferred_element_type=jnp.float32)
            m_sc[h] = m_new

    @pl.when(kvi == pl.num_programs(2) - 1)
    def _finalize():
        # NOTE: assumes every batch entry has >= 1 valid context word (as in the
        # torch module's usage); nwords==0 would divide by zero here.
        outs = [acc_sc[h] * pl.reciprocal(l_sc[h], approx=True)
                for h in range(num_heads)]
        # single lane-dense (TQ, C) store, head-major channel order (matches torch reshape)
        o_ref[...] = jnp.concatenate(outs, axis=-1).astype(o_ref.dtype)


def pallas_cross_attention(nwords, q, k, v, *, num_heads, head_dim, tq, tkv):
    """q:(B,H,Pmax,hd), k/v:(B,H,Wmax,hd) bf16, nwords:(B,) int32 -> (B, Pmax, C) bf16."""
    B, H, p_max, hd = q.shape
    w_max = k.shape[2]
    C = num_heads * head_dim
    assert p_max % tq == 0 and w_max % tkv == 0

    def q_map(b, qi, kvi, nw):
        return (b, 0, qi, 0)

    def kv_map(b, qi, kvi, nw):
        # Clamp the kv block index to the last block containing valid keys so a
        # fully-padded tile re-uses the previously fetched block (no extra DMA).
        last = jnp.maximum((nw[b] + tkv - 1) // tkv - 1, 0)
        return (b, 0, jnp.minimum(kvi, last), 0)

    def o_map(b, qi, kvi, nw):
        return (b, qi, 0)

    return pl.pallas_call(
        partial(_flash_xattn_kernel, num_heads=num_heads, tkv=tkv),
        out_shape=jax.ShapeDtypeStruct((B, p_max, C), q.dtype),
        grid_spec=pltpu.PrefetchScalarGridSpec(
            num_scalar_prefetch=1,
            grid=(B, p_max // tq, w_max // tkv),   # reduction (kv) axis last
            in_specs=[
                pl.BlockSpec((None, H, tq, hd), q_map),
                pl.BlockSpec((None, H, tkv, hd), kv_map),
                pl.BlockSpec((None, H, tkv, hd), kv_map),
            ],
            out_specs=pl.BlockSpec((None, tq, C), o_map),
            scratch_shapes=[
                pltpu.VMEM((H, tq, 1), jnp.float32),   # running max m
                pltpu.VMEM((H, tq, 1), jnp.float32),   # running sum l
                pltpu.VMEM((H, tq, hd), jnp.float32),  # output accumulator
            ],
        ),
        compiler_params=pltpu.CompilerParams(
            dimension_semantics=("parallel", "parallel", "arbitrary"),
            vmem_limit_bytes=_vmem_limit_bytes(),
        ),
    )(nwords, q, k, v)


# ----------------------------------------------------------------------------
# Module wrapper
# ----------------------------------------------------------------------------
class CrossAttentionPallas:
    def __init__(self, channels, num_heads, kv_channels=None, *, key):
        assert channels % num_heads == 0
        if kv_channels is None:
            kv_channels = channels
        self.channels = channels
        self.num_heads = num_heads
        self.head_dim = channels // num_heads
        self.scale = self.head_dim ** (-0.5)
        k1, k2, k3, k4, k5, k6 = jax.random.split(key, 6)
        C = channels
        sq = 1.0 / np.sqrt(channels)
        sk = 1.0 / np.sqrt(kv_channels)
        # torch Linear(channels, channels): store W as (Cin, Cout) so y = x @ W + b.
        # Softmax scale is folded into the q projection (free: same math as q*scale).
        self.w_q = (jax.random.normal(k1, (channels, C), jnp.float32) * sq
                    * self.scale).astype(jnp.bfloat16)
        self.b_q = (jax.random.normal(k2, (C,), jnp.float32) * 0.02 * self.scale)
        self.w_kv = (jax.random.normal(k3, (kv_channels, 2 * C), jnp.float32)
                     * sk).astype(jnp.bfloat16)
        self.b_kv = jax.random.normal(k4, (2 * C,), jnp.float32) * 0.02
        self.w_proj = (jax.random.normal(k5, (C, C), jnp.float32) * sq).astype(jnp.bfloat16)
        self.b_proj = jax.random.normal(k6, (C,), jnp.float32) * 0.02

    def forward(self, feat, context, offset, context_offset, *, tq=None, tkv=None):
        C, H, hd = self.channels, self.num_heads, self.head_dim
        npoints = offset2bincount(offset)
        nwords = offset2bincount(context_offset)
        B = len(npoints)

        # projections -> bf16 activations (halves attention-side DMA bytes)
        q = pallas_linear(feat, self.w_q, self.b_q)          # (Nq, C) bf16 (scale folded)
        kv = pallas_linear(context, self.w_kv, self.b_kv)    # (Nk, 2C) bf16
        k, v = kv[:, :C], kv[:, C:]                          # torch view(-1, 2, H, hd)

        max_np, max_nw = int(npoints.max()), int(nwords.max())
        if tq is None:
            tq = min(128, _round_up(max_np, 8))
            if B == 1 and max_np > 8 and tq >= max_np:
                # v7x: give both TensorCores at least one grid step
                tq = _round_up((max_np + 1) // 2, 8)
        if tkv is None:
            tkv = min(512, _round_up(max_nw, 8))
        p_max = _bucket(max_np, tq)
        w_max = _bucket(max_nw, tkv)

        # host-side pad + head-major (B,H,seq,hd) layout (bf16 -> cheap), then attention.
        # NOTE: head_dim < 128 pads the lane dim of each per-head block; acceptable since
        # the kernel is softmax-bound.  TODO(synk): fuse pad/transpose/unpad into the
        # kernel via scalar-prefetched cu_seqlens (varlen gather).
        q_pad = _pad_rows(q, npoints, p_max).reshape(B, p_max, H, hd).transpose(0, 2, 1, 3)
        k_pad = _pad_rows(k, nwords, w_max).reshape(B, w_max, H, hd).transpose(0, 2, 1, 3)
        v_pad = _pad_rows(v, nwords, w_max).reshape(B, w_max, H, hd).transpose(0, 2, 1, 3)
        nwords_dev = jnp.asarray(nwords, jnp.int32)

        out_pad = pallas_cross_attention(
            nwords_dev, q_pad, k_pad, v_pad,
            num_heads=H, head_dim=hd, tq=tq, tkv=tkv)                 # (B, Pmax, C) bf16

        idx = _unpad_indices(npoints, p_max)
        feat_out = out_pad.reshape(B * p_max, C)[jnp.asarray(idx)]    # (Nq, C) bf16
        # final projection (dropout is a no-op at inference); fp32 output like torch .float()
        return pallas_linear(feat_out, self.w_proj, self.b_proj, out_dtype=jnp.float32)

    # pure-JAX reference mirroring the torch non-flash branch with the same
    # bf16-in / fp32-accumulate precision path as the kernels.
    def reference(self, feat, context, offset, context_offset):
        C, H, hd = self.channels, self.num_heads, self.head_dim
        npoints = offset2bincount(offset)
        nwords = offset2bincount(context_offset)
        B = len(npoints)

        def lin(x, w, b, out_dtype):
            y = jnp.dot(x.astype(jnp.bfloat16), w.astype(jnp.bfloat16),
                        preferred_element_type=jnp.float32) + b
            return y.astype(out_dtype)

        q = lin(feat, self.w_q, self.b_q, jnp.bfloat16)
        kv = lin(context, self.w_kv, self.b_kv, jnp.bfloat16)
        k, v = kv[:, :C], kv[:, C:]

        p_max, w_max = int(npoints.max()), int(nwords.max())
        q_pad = _pad_rows(q, npoints, p_max).reshape(B, p_max, H, hd)
        k_pad = _pad_rows(k, nwords, w_max).reshape(B, w_max, H, hd)
        v_pad = _pad_rows(v, nwords, w_max).reshape(B, w_max, H, hd)

        key_valid = np.arange(w_max)[None, :] < np.asarray(nwords)[:, None]     # (B, W)
        logits = jnp.einsum("bphd,bwhd->bpwh",
                            q_pad.astype(jnp.bfloat16), k_pad.astype(jnp.bfloat16),
                            preferred_element_type=jnp.float32)
        logits = jnp.where(jnp.asarray(key_valid)[:, None, :, None], logits, -10000.0)
        probs = jax.nn.softmax(logits, axis=2)
        out = jnp.einsum("bpwh,bwhd->bphd",
                         probs.astype(jnp.bfloat16), v_pad.astype(jnp.bfloat16),
                         preferred_element_type=jnp.float32)
        out = out.reshape(B, p_max, C).astype(jnp.bfloat16)

        idx = _unpad_indices(npoints, p_max)
        feat_out = out.reshape(B * p_max, C)[jnp.asarray(idx)]
        return lin(feat_out, self.w_proj, self.b_proj, jnp.float32)


if __name__ == "__main__":
    key = jax.random.PRNGKey(0)
    k_feat, k_ctx, k_params = jax.random.split(key, 3)

    channels = 128          # C multiple of 128 -> lane-dense output stores
    num_heads = 4           # head_dim = 32
    # two point clouds: 40 & 72 query points, 25 & 61 context "words"
    offset = np.array([40, 112], dtype=np.int64)
    context_offset = np.array([25, 86], dtype=np.int64)
    Nq, Nk = int(offset[-1]), int(context_offset[-1])

    feat = jax.random.normal(k_feat, (Nq, channels), jnp.float32)
    context = jax.random.normal(k_ctx, (Nk, channels), jnp.float32)

    module = CrossAttentionPallas(channels, num_heads, kv_channels=channels, key=k_params)

    # small tq/tkv so the test exercises query tiling, kv tiling (online softmax)
    # and the padded-kv-tile skip path (batch 0 has 25 valid keys of w_max=64).
    out = module.forward(feat, context, offset, context_offset, tq=32, tkv=32)
    out = jax.block_until_ready(out)

    ref = module.reference(feat, context, offset, context_offset)
    ref = jax.block_until_ready(ref)

    assert out.shape == (Nq, channels)
    np.testing.assert_allclose(np.asarray(out, np.float32), np.asarray(ref, np.float32),
                               rtol=2e-2, atol=2e-2)
    print("KERNEL_OK")
</pallas_src>

<mosaic_0001>
module attributes {stable_mosaic.version = 11 : i64} {
  func.func @_linear_kernel(%arg0: i32, %arg1: memref<112x128xf32, #tpu.memory_space<vmem>>, %arg2: memref<128x128xbf16, #tpu.memory_space<vmem>>, %arg3: memref<1x128xf32, #tpu.memory_space<vmem>>, %arg4: memref<112x128xbf16, #tpu.memory_space<vmem>>) attributes {dimension_semantics = [#tpu.dimension_semantics<parallel>], iteration_bounds = array<i64: 1>, scalar_prefetch = 0 : i64, scratch_operands = 0 : i64, tpu.core_type = #tpu.core_type<tc>, window_params = [{transform_indices = @transform_0, window_bounds = array<i64: 112, 128>}, {pipeline_mode = #tpu.pipeline_mode<synchronous>, transform_indices = @transform_1, window_bounds = array<i64: 128, 128>}, {pipeline_mode = #tpu.pipeline_mode<synchronous>, transform_indices = @transform_2, window_bounds = array<i64: 1, 128>}, {transform_indices = @transform_3, window_bounds = array<i64: 112, 128>}]} {
    %c0 = arith.constant 0 : index
    %c0_0 = arith.constant 0 : index
    %0 = vector.load %arg1[%c0, %c0_0] : memref<112x128xf32, #tpu.memory_space<vmem>>, vector<112x128xf32>
    %1 = arith.truncf %0 : vector<112x128xf32> to vector<112x128xbf16>
    %c0_1 = arith.constant 0 : index
    %c0_2 = arith.constant 0 : index
    %2 = vector.load %arg2[%c0_1, %c0_2] : memref<128x128xbf16, #tpu.memory_space<vmem>>, vector<128x128xbf16>
    %cst = arith.constant dense<0.000000e+00> : vector<112x128xf32>
    %3 = tpu.matmul %1, %2, %cst {dimension_numbers = #tpu.dot_dimension_numbers<[1], [0], [0], [1], [0, 0, 1, 1], [], []>} : vector<112x128xbf16>, vector<128x128xbf16>, vector<112x128xf32> -> vector<112x128xf32>
    %c0_3 = arith.constant 0 : index
    %c0_4 = arith.constant 0 : index
    %4 = vector.load %arg3[%c0_3, %c0_4] : memref<1x128xf32, #tpu.memory_space<vmem>>, vector<1x128xf32>
    %5 = vector.broadcast %4 : vector<1x128xf32> to vector<112x128xf32>
    %6 = arith.addf %3, %5 : vector<112x128xf32>
    %7 = arith.truncf %6 : vector<112x128xf32> to vector<112x128xbf16>
    %c0_5 = arith.constant 0 : index
    %c0_6 = arith.constant 0 : index
    %8 = vector.load %arg4[%c0_5, %c0_6] : memref<112x128xbf16, #tpu.memory_space<vmem>>, vector<112x128xbf16>
    tpu.vector_store %arg4[%c0_5, %c0_6], %7 {strides = array<i32>} : memref<112x128xbf16, #tpu.memory_space<vmem>>, vector<112x128xbf16>,
    return
  }
  func.func @transform_0(%arg0: i32) -> (i32, i32) {
    %c0_i32 = arith.constant 0 : i32
    %c0_i32_0 = arith.constant 0 : i32
    return %arg0, %c0_i32 : i32, i32
  }
  func.func @transform_1(%arg0: i32) -> (i32, i32) {
    %c0_i32 = arith.constant 0 : i32
    %c0_i32_0 = arith.constant 0 : i32
    %c0_i32_1 = arith.constant 0 : i32
    return %c0_i32, %c0_i32_0 : i32, i32
  }
  func.func @transform_2(%arg0: i32) -> (i32, i32) {
    %c0_i32 = arith.constant 0 : i32
    %c0_i32_0 = arith.constant 0 : i32
    %c0_i32_1 = arith.constant 0 : i32
    return %c0_i32, %c0_i32_0 : i32, i32
  }
  func.func @transform_3(%arg0: i32) -> (i32, i32) {
    %c0_i32 = arith.constant 0 : i32
    %c0_i32_0 = arith.constant 0 : i32
    return %arg0, %c0_i32 : i32, i32
  }
}

</mosaic_0001>

<llo_original>
// kernel: tpu_custom_call.1
$region0: #{tpu_custom_call.1}
  #allocation0 [shape = 'u32[]', space=smem, size = 0x4, offset = 0x4, fixed_abs, tag = 'smem constant byte address 0x4 - core index']
  #allocation1 [shape = 'u32[144,128]{1,0:T(1,128)}', space=vmem, size = 0x12000, scoped, tag = 'internal scratch']
  %s0 = inlined_call_operand.hbm [shape: f32[112,128], index: 0, kind: input, shape index: {}]
  %s1 = inlined_call_operand.hbm [shape: bf16[128,128], index: 1, kind: input, shape index: {}]
  %s2 = inlined_call_operand.vmem [shape: f32[1,128], index: 2, kind: input, shape index: {}]
  %s3 = inlined_call_operand.hbm [shape: bf16[112,128], index: 3, kind: output, shape index: {}]
  %s4 = sld [smem:[#allocation0]]
  $region30: #{tpu_custom_call.1} parent=0
    _
  %s6 = ssub.s32 1, %s4
  %s7 = scalar_select 0, %s6, %s4
  $region1: #{tpu_custom_call.1} parent=0
    #allocation2 [shape = 'u8[57344]{0}', space=vmem, size = 0xe000, scoped, tag = 'input window, operand 0, single buffered']
    #allocation3 [shape = 's32[1]{0}', space=sflag, size = 0x4, scoped, tag = 'scoped memory for tpu_custom_call.1']
    #allocation4 [shape = 's32[1]{0}', space=sflag, size = 0x4, scoped, tag = 'scoped memory for tpu_custom_call.1']
    #allocation5 [shape = 'u8[32768]{0}', space=vmem, size = 0x8000, scoped, tag = 'input window, operand 1, single buffered']
    #allocation6 [shape = 's32[1]{0}', space=sflag, size = 0x4, scoped, tag = 'scoped memory for tpu_custom_call.1']
    #allocation7 [shape = 'u8[28672]{0}', space=vmem, size = 0x7000, scoped, tag = 'output window, operand 0, single buffered']
    %8 = vsyncpa [#allocation3], 0
    %9 = vsyncpa [#allocation6], 0
    %10 = vsyncpa [#allocation4], 0
    // Predicated region
    $region2: #{tpu_custom_call.1} parent=1 // pred_check
      _
    $region3: #{tpu_custom_call.1} parent=1 // pred_check_branch
      %12 = sbr.rel (0) target = $region5
    $region4: #{tpu_custom_call.1} parent=1 // pred_region
      %s14 = ssub.s32 1792, 1792
      %15 = vsyncadd [#allocation3], %s14
      %s16 = sshll.u32 [#allocation2], 4
      %s17 = int_to_ptr.vmem [resolvable:$true] %s16
      %22 = dma.hbm_to_vmem [thread:$0]  %s0, 1792, %s17, [#allocation3], 128, 128, 8
    $region5: #{tpu_custom_call.1} parent=1 // pred_fallthru
      _
    // Predicated region
    $region6: #{tpu_custom_call.1} parent=1 // pred_check
      _
    $region7: #{tpu_custom_call.1} parent=1 // pred_check_branch
      %24 = sbr.rel (0) target = $region9
    $region8: #{tpu_custom_call.1} parent=1 // pred_region
      %s26 = ssub.s32 1024, 1024
      %27 = vsyncadd [#allocation6], %s26
      %s28 = sshll.u32 [#allocation5], 4
      %s29 = int_to_ptr.vmem [resolvable:$true] %s28
      %34 = dma.hbm_to_vmem [thread:$0]  %s1, 1024, %s29, [#allocation6], 64, 64, 4
    $region9: #{tpu_custom_call.1} parent=1 // pred_fallthru
      _
    // Predicated region
    $region10: #{tpu_custom_call.1} parent=1 // pred_check
      _
    $region11: #{tpu_custom_call.1} parent=1 // pred_check_branch
      %36 = sbr.rel (0) target = $region13
    $region12: #{tpu_custom_call.1} parent=1 // pred_region
      _
    $region13: #{tpu_custom_call.1} parent=1 // pred_fallthru
      _
    // Predicated region
    $region14: #{tpu_custom_call.1} parent=1 // pred_check
      _
    $region15: #{tpu_custom_call.1} parent=1 // pred_check_branch
      %38 = sbr.rel (0) target = $region17
    $region16: #{tpu_custom_call.1} parent=1 // pred_region
      %39 = dma.done [#allocation3], 1792
    $region17: #{tpu_custom_call.1} parent=1 // pred_fallthru
      _
    // Predicated region
    $region18: #{tpu_custom_call.1} parent=1 // pred_check
      _
    $region19: #{tpu_custom_call.1} parent=1 // pred_check_branch
      %41 = sbr.rel (0) target = $region21
    $region20: #{tpu_custom_call.1} parent=1 // pred_region
      %42 = dma.done [#allocation6], 1024
    $region21: #{tpu_custom_call.1} parent=1 // pred_fallthru
      _
    %v44 = vld [vmem:[#allocation2] sm:$0xff]
    %v45 = vld [vmem:[#allocation2 + $0x8] sm:$0xff]
    %v46 = vld [vmem:[#allocation2 + $0x10] sm:$0xff]
    %v47 = vld [vmem:[#allocation2 + $0x18] sm:$0xff]
    %v48 = vld [vmem:[#allocation2 + $0x20] sm:$0xff]
    %v49 = vld [vmem:[#allocation2 + $0x28] sm:$0xff]
    %v50 = vld [vmem:[#allocation2 + $0x30] sm:$0xff]
    %v51 = vld [vmem:[#allocation2 + $0x38] sm:$0xff]
    %v52 = vld [vmem:[#allocation2 + $0x40] sm:$0xff]
    %v53 = vld [vmem:[#allocation2 + $0x48] sm:$0xff]
    %v54 = vld [vmem:[#allocation2 + $0x50] sm:$0xff]
    %v55 = vld [vmem:[#allocation2 + $0x58] sm:$0xff]
    %v56 = vld [vmem:[#allocation2 + $0x60] sm:$0xff]
    %v57 = vld [vmem:[#allocation2 + $0x68] sm:$0xff]
    %v58 = vpack.c.bf16 %v45, %v44
    %v59 = vpack.c.bf16 %v47, %v46
    %v60 = vpack.c.bf16 %v49, %v48
    %v61 = vpack.c.bf16 %v51, %v50
    %v62 = vpack.c.bf16 %v53, %v52
    %v63 = vpack.c.bf16 %v55, %v54
    %v64 = vpack.c.bf16 %v57, %v56
    %v65 = vld [vmem:[#allocation5] sm:$0xf]
    %v66 = vld [vmem:[#allocation5 + $0x4] sm:$0xf]
    %v67 = vld [vmem:[#allocation5 + $0x8] sm:$0xf]
    %v68 = vld [vmem:[#allocation5 + $0xc] sm:$0xf]
    %v69 = vld [vmem:[#allocation5 + $0x10] sm:$0xf]
    %v70 = vld [vmem:[#allocation5 + $0x14] sm:$0xf]
    %v71 = vld [vmem:[#allocation5 + $0x18] sm:$0xf]
    %v72 = vld [vmem:[#allocation5 + $0x1c] sm:$0xf]
    %v73 = vld [vmem:[#allocation5 + $0x20] sm:$0xf]
    %v74 = vld [vmem:[#allocation5 + $0x24] sm:$0xf]
    %v75 = vld [vmem:[#allocation5 + $0x28] sm:$0xf]
    %v76 = vld [vmem:[#allocation5 + $0x2c] sm:$0xf]
    %v77 = vld [vmem:[#allocation5 + $0x30] sm:$0xf]
    %v78 = vld [vmem:[#allocation5 + $0x34] sm:$0xf]
    %v79 = vld [vmem:[#allocation5 + $0x38] sm:$0xf]
    %v80 = vld [vmem:[#allocation5 + $0x3c] sm:$0xf]
    %v81 = vld [vmem:[%s2] sm:$0x1]
    %v83 = vlaneseq
    %v84 = vshrl.u32 %v83, 7
    %v85 = vsub.s32 0, %v84
    %v86 = vrot.slane %v81, %v85
    %v104 = vunpack.c.l.b16 %v65
    %v105 = vunpack.c.l.b16 %v66
    %v106 = vunpack.c.l.b16 %v67
    %v107 = vunpack.c.l.b16 %v68
    %v108 = vunpack.c.l.b16 %v69
    %v109 = vunpack.c.l.b16 %v70
    %v110 = vunpack.c.l.b16 %v71
    %v111 = vunpack.c.l.b16 %v72
    %v112 = vunpack.c.l.b16 %v73
    %v113 = vunpack.c.l.b16 %v74
    %v114 = vunpack.c.l.b16 %v75
    %v115 = vunpack.c.l.b16 %v76
    %v116 = vunpack.c.l.b16 %v77
    %v117 = vunpack.c.l.b16 %v78
    %v118 = vunpack.c.l.b16 %v79
    %v119 = vunpack.c.l.b16 %v80
    %v120 = vpack.c.b16 %v105, %v104
    %v121 = vpack.c.b16 %v107, %v106
    %v122 = vpack.c.b16 %v109, %v108
    %v123 = vpack.c.b16 %v111, %v110
    %v124 = vpack.c.b16 %v113, %v112
    %v125 = vpack.c.b16 %v115, %v114
    %v126 = vpack.c.b16 %v117, %v116
    %v127 = vpack.c.b16 %v119, %v118
    %136 = vmatprep.subr.bf16.mxu0 0
    %137 = vmatpush1.bf16.msra.mxu0 %v127
    %138 = vmatprep.subr.bf16.mxu0 0
    %139 = vmatpush1.bf16.msra.mxu0 %v126
    %140 = vmatprep.subr.bf16.mxu0 0
    %141 = vmatpush1.bf16.msra.mxu0 %v125
    %142 = vmatprep.subr.bf16.mxu0 0
    %143 = vmatpush1.bf16.msra.mxu0 %v124
    %144 = vmatprep.subr.bf16.mxu0 0
    %145 = vmatpush1.bf16.msra.mxu0 %v123
    %146 = vmatprep.subr.bf16.mxu0 0
    %147 = vmatpush1.bf16.msra.mxu0 %v122
    %148 = vmatprep.subr.bf16.mxu0 0
    %149 = vmatpush1.bf16.msra.mxu0 %v121
    %150 = vmatprep.subr.bf16.mxu0 0
    %151 = vmatpush1.bf16.msra.mxu0 %v120
    %152 = vmatprep.subr.bf16.mxu0 0
    %153 = vmatpush2.bf16.msra.mxu0 0
    %154 = vmatprep.subr.bf16.mxu0 0
    %155 = vmatpush2.bf16.msra.mxu0 0
    %156 = vmatprep.subr.bf16.mxu0 0
    %157 = vmatpush2.bf16.msra.mxu0 0
    %158 = vmatprep.subr.bf16.mxu0 0
    %159 = vmatpush2.bf16.msra.mxu0 0
    %160 = vmatprep.subr.bf16.mxu0 0
    %161 = vmatpush2.bf16.msra.mxu0 0
    %162 = vmatprep.subr.bf16.mxu0 0
    %163 = vmatpush2.bf16.msra.mxu0 0
    %164 = vmatprep.subr.bf16.mxu0 0
    %165 = vmatpush2.bf16.msra.mxu0 0
    %166 = vmatprep.subr.bf16.mxu0 0
    %167 = vmatpush2.bf16.msra.mxu0 0
    %168 = vmatprep.mubr.bf16.mxu0 0
    %169 = vmatmul.mubr.bf16.gmra.mxu0 %v58
    %v170 = vpop.f32.mrf.mxu0
    %v171 = vadd.f32 %v86, %v170
    %v172 = vpop.f32.mrf.mxu0
    %v173 = vpop.f32.mrf.mxu0
    %v174 = vadd.f32 %v86, %v173
    %v175 = vpop.f32.mrf.mxu0
    %176 = vmatprep.mubr.bf16.mxu0 0
    %177 = vmatmul.mubr.bf16.gmra.mxu0 %v59
    %v178 = vpop.f32.mrf.mxu0
    %v179 = vadd.f32 %v86, %v178
    %v180 = vpop.f32.mrf.mxu0
    %v181 = vpop.f32.mrf.mxu0
    %v182 = vadd.f32 %v86, %v181
    %v183 = vpop.f32.mrf.mxu0
    %184 = vmatprep.mubr.bf16.mxu0 0
    %185 = vmatmul.mubr.bf16.gmra.mxu0 %v60
    %v186 = vpop.f32.mrf.mxu0
    %v187 = vadd.f32 %v86, %v186
    %v188 = vpop.f32.mrf.mxu0
    %v189 = vpop.f32.mrf.mxu0
    %v190 = vadd.f32 %v86, %v189
    %v191 = vpop.f32.mrf.mxu0
    %192 = vmatprep.mubr.bf16.mxu0 0
    %193 = vmatmul.mubr.bf16.gmra.mxu0 %v61
    %v194 = vpop.f32.mrf.mxu0
    %v195 = vadd.f32 %v86, %v194
    %v196 = vpop.f32.mrf.mxu0
    %v197 = vpop.f32.mrf.mxu0
    %v198 = vadd.f32 %v86, %v197
    %v199 = vpop.f32.mrf.mxu0
    %200 = vmatprep.mubr.bf16.mxu0 0
    %201 = vmatmul.mubr.bf16.gmra.mxu0 %v62
    %v202 = vpop.f32.mrf.mxu0
    %v203 = vadd.f32 %v86, %v202
    %v204 = vpop.f32.mrf.mxu0
    %v205 = vpop.f32.mrf.mxu0
    %v206 = vadd.f32 %v86, %v205
    %v207 = vpop.f32.mrf.mxu0
    %208 = vmatprep.mubr.bf16.mxu0 0
    %209 = vmatmul.mubr.bf16.gmra.mxu0 %v63
    %v210 = vpop.f32.mrf.mxu0
    %v211 = vadd.f32 %v86, %v210
    %v212 = vpop.f32.mrf.mxu0
    %v213 = vpop.f32.mrf.mxu0
    %v214 = vadd.f32 %v86, %v213
    %v215 = vpop.f32.mrf.mxu0
    %216 = vmatprep.mubr.bf16.mxu0 0
    %217 = vmatmul.mubr.bf16.gmra.mxu0 %v64
    %v218 = vpop.f32.mrf.mxu0
    %v219 = vadd.f32 %v86, %v218
    %v220 = vpop.f32.mrf.mxu0
    %v221 = vpop.f32.mrf.mxu0
    %v222 = vadd.f32 %v86, %v221
    %v223 = vpop.f32.mrf.mxu0
    %224 = vdwg.mxu0
    %v225 = vpack.c.bf16 %v174, %v171
    %v226 = vpack.c.bf16 %v182, %v179
    %v227 = vpack.c.bf16 %v190, %v187
    %v228 = vpack.c.bf16 %v198, %v195
    %v229 = vpack.c.bf16 %v206, %v203
    %v230 = vpack.c.bf16 %v214, %v211
    %v231 = vpack.c.bf16 %v222, %v219
    %v239 = vunpack.c.l.b16 %v225
    %v240 = vunpack.c.h.b16 %v225
    %v241 = vunpack.c.l.b16 %v226
    %v242 = vunpack.c.h.b16 %v226
    %v243 = vunpack.c.l.b16 %v227
    %v244 = vunpack.c.h.b16 %v227
    %v245 = vunpack.c.l.b16 %v228
    %v246 = vunpack.c.h.b16 %v228
    %v247 = vunpack.c.l.b16 %v229
    %v248 = vunpack.c.h.b16 %v229
    %v249 = vunpack.c.l.b16 %v230
    %v250 = vunpack.c.h.b16 %v230
    %v251 = vunpack.c.l.b16 %v231
    %v252 = vunpack.c.h.b16 %v231
    %v253 = vpack.c.b16 %v239, %v239
    %v254 = vpack.c.b16 %v240, %v240
    %v255 = vpack.c.b16 %v241, %v241
    %v256 = vpack.c.b16 %v242, %v242
    %v257 = vpack.c.b16 %v243, %v243
    %v258 = vpack.c.b16 %v244, %v244
    %v259 = vpack.c.b16 %v245, %v245
    %v260 = vpack.c.b16 %v246, %v246
    %v261 = vpack.c.b16 %v247, %v247
    %v262 = vpack.c.b16 %v248, %v248
    %v263 = vpack.c.b16 %v249, %v249
    %v264 = vpack.c.b16 %v250, %v250
    %v265 = vpack.c.b16 %v251, %v251
    %v266 = vpack.c.b16 %v252, %v252
    %281 = vst [vmem:[#allocation7] sm:$0xf] %v253
    %282 = vst [vmem:[#allocation7 + $0x4] sm:$0xf] %v254
    %283 = vst [vmem:[#allocation7 + $0x8] sm:$0xf] %v255
    %284 = vst [vmem:[#allocation7 + $0xc] sm:$0xf] %v256
    %285 = vst [vmem:[#allocation7 + $0x10] sm:$0xf] %v257
    %286 = vst [vmem:[#allocation7 + $0x14] sm:$0xf] %v258
    %287 = vst [vmem:[#allocation7 + $0x18] sm:$0xf] %v259
    %288 = vst [vmem:[#allocation7 + $0x1c] sm:$0xf] %v260
    %289 = vst [vmem:[#allocation7 + $0x20] sm:$0xf] %v261
    %290 = vst [vmem:[#allocation7 + $0x24] sm:$0xf] %v262
    %291 = vst [vmem:[#allocation7 + $0x28] sm:$0xf] %v263
    %292 = vst [vmem:[#allocation7 + $0x2c] sm:$0xf] %v264
    %293 = vst [vmem:[#allocation7 + $0x30] sm:$0xf] %v265
    %294 = vst [vmem:[#allocation7 + $0x34] sm:$0xf] %v266
    // Predicated region
    $region22: #{tpu_custom_call.1} parent=1 // pred_check
      _
    $region23: #{tpu_custom_call.1} parent=1 // pred_check_branch
      %296 = sbr.rel (0) target = $region25
    $region24: #{tpu_custom_call.1} parent=1 // pred_region
      %s298 = ssub.s32 896, 896
      %299 = vsyncadd [#allocation4], %s298
      %s300 = sshll.u32 [#allocation7], 4
      %s301 = int_to_ptr.vmem [resolvable:$true] %s300
      %306 = dma.vmem_to_hbm [thread:$0]  %s301, 896, %s3, [#allocation4], 64, 64, 4
    $region25: #{tpu_custom_call.1} parent=1 // pred_fallthru
      _
    // Predicated region
    $region26: #{tpu_custom_call.1} parent=1 // pred_check
      _
    $region27: #{tpu_custom_call.1} parent=1 // pred_check_branch
      %308 = sbr.rel (0) target = $region29
    $region28: #{tpu_custom_call.1} parent=1 // pred_region
      %309 = dma.done [#allocation4], 896
    $region29: #{tpu_custom_call.1} parent=1 // pred_fallthru
      _
    %310 = vsyncpa [#allocation3], 1
    %311 = vsyncpa [#allocation6], 1
    %312 = vsyncpa [#allocation4], 1

</llo_original>
